<compile_context>
chip_gen: v5e
topology: v5e:2x2
jax: 0.10.0
libtpu: 0.0.40
codegen_flags: <defaults>
</compile_context>

<pallas_src>
import functools

import jax
import jax.numpy as jnp
from jax.experimental import pallas as pl
from jax.experimental.pallas import tpu as pltpu


def _round_up(x, m):
    return (x + m - 1) // m * m


def _pl_kernel(y_ref, loss_ref, mask_ref, *, threshold, num_classes, inv_n,
               n_valid, tile_m, has_pad):
    """y_ref: [C, tile_m] unlabeled logits (classes on sublanes, rows on lanes).

    Outputs: loss_ref [1, 1] (resident accumulator across the grid),
             mask_ref [1, tile_m] lane-dense gt_mask slab for this tile.
    """
    i = pl.program_id(0)

    @pl.when(i == 0)
    def _():
        loss_ref[...] = jnp.zeros_like(loss_ref)

    y = y_ref[...].astype(jnp.float32)                        # [C, T]

    # --- softmax statistics along classes (sublane reductions) ---
    m = jnp.max(y, axis=0, keepdims=True)                     # [1, T]
    z = y - m                                                  # [C, T]
    ez = jnp.exp(z)                                            # [C, T]  (EUP)
    s = jnp.sum(ez, axis=0, keepdims=True)                     # [1, T]
    a = jnp.sum(ez * z, axis=0, keepdims=True)                 # [1, T]
    inv_s = 1.0 / s                                            # hoisted, exact
    log_s = jnp.log(s)                                         # [1, T]  (EUP)

    # max prob of a row is exp(0)/s = 1/s, so the confidence mask is just:
    gt_mask = (inv_s > threshold).astype(jnp.float32)          # [1, T]

    # unconfident-row loss: -sum(p * logp) = log(s) - a/s
    # confident-row loss:   -num_classes * logp[argmax] = num_classes*log(s)
    ent = log_s - a * inv_s                                    # [1, T]
    row_loss = ent + gt_mask * (num_classes * log_s - ent)     # [1, T]

    if has_pad:
        # mask out padded columns (rows beyond the true unlabeled count)
        col = i * tile_m + jax.lax.broadcasted_iota(jnp.int32, (1, tile_m), 1)
        valid = (col < n_valid).astype(jnp.float32)            # [1, T]
        row_loss = row_loss * valid
        gt_mask = gt_mask * valid

    loss_ref[...] += jnp.sum(row_loss, axis=1, keepdims=True) * inv_n
    mask_ref[...] = gt_mask


def pl_forward(x, y, batch_size, *, threshold, num_classes, tile_m=2048):
    """Pallas equivalent of PL.forward(x, y, model, batch_size) -> (loss, gt_mask)."""
    del x  # x is not used by PL.forward (only carried through in the PyTorch API)

    y_u = y[batch_size:, :]
    M, C = y_u.shape
    assert M > 0, "PL loss requires at least one unlabeled sample"

    # Lane-dense layout: classes on sublanes, rows on lanes (padded to tile).
    tile = min(_round_up(int(tile_m), 128), _round_up(M, 128))
    m_pad = _round_up(M, tile)
    num_tiles = m_pad // tile
    has_pad = m_pad != M

    # Layout plumbing (wrapper-side): [M, C] -> [C, M_pad] so the kernel sees a
    # fully packed lane-dense slab.
    y_t = jnp.transpose(y_u)                                   # [C, M], keep input dtype
    if has_pad:
        y_t = jnp.pad(y_t, ((0, 0), (0, m_pad - M)))

    kernel = functools.partial(
        _pl_kernel,
        threshold=float(threshold),
        num_classes=float(num_classes),
        inv_n=1.0 / float(M),
        n_valid=int(M),
        tile_m=int(tile),
        has_pad=bool(has_pad),
    )

    loss, gt_mask = pl.pallas_call(
        kernel,
        out_shape=(
            jax.ShapeDtypeStruct((1, 1), jnp.float32),         # scalar loss
            jax.ShapeDtypeStruct((1, m_pad), jnp.float32),     # lane-dense gt_mask
        ),
        grid_spec=pltpu.PrefetchScalarGridSpec(
            num_scalar_prefetch=0,
            grid=(num_tiles,),
            in_specs=[pl.BlockSpec((C, tile), lambda i: (0, i))],
            out_specs=(
                pl.BlockSpec((1, 1), lambda i: (0, 0)),        # resident accumulator
                pl.BlockSpec((1, tile), lambda i: (0, i)),
            ),
        ),
        compiler_params=pltpu.CompilerParams(
            dimension_semantics=("arbitrary",),                # reduction axis for loss
        ),
    )(y_t)

    return loss[0, 0], gt_mask[0, :M]


def _reference(y, batch_size, threshold, num_classes):
    """Pure-JAX reference of the PyTorch forward for validation."""
    y = y.astype(jnp.float32)
    y_probs = jax.nn.softmax(y, axis=1)[batch_size:, :]
    onehot = jax.nn.one_hot(jnp.argmax(y_probs, axis=1), num_classes, dtype=jnp.float32)
    gt_mask = jnp.max((y_probs > threshold).astype(jnp.float32), axis=1)
    lt_mask = 1.0 - gt_mask
    p_target = gt_mask[:, None] * num_classes * onehot + lt_mask[:, None] * y_probs
    logp = jax.nn.log_softmax(y, axis=1)[batch_size:, :]
    loss = jnp.mean(-jnp.sum(p_target * logp, axis=1))
    return loss, gt_mask


if __name__ == "__main__":
    key = jax.random.PRNGKey(0)
    kx, ky, ky2 = jax.random.split(key, 3)

    num_classes = 10        # CIFAR-10
    threshold = 0.95
    batch_size = 4          # labeled rows
    n_unlabeled = 8
    n_total = batch_size + n_unlabeled

    # x: NCHW image batch (unused by PL.forward, included for signature fidelity)
    x = jax.random.normal(kx, (batch_size, 3, 8, 8), dtype=jnp.float32)
    # y: logits for labeled + unlabeled samples
    y = 4.0 * jax.random.normal(ky, (n_total, num_classes), dtype=jnp.float32)

    loss, gt_mask = pl_forward(x, y, batch_size,
                               threshold=threshold, num_classes=num_classes)
    jax.block_until_ready((loss, gt_mask))

    loss_ref, mask_ref = _reference(y, batch_size, threshold, num_classes)
    assert jnp.allclose(loss, loss_ref, rtol=1e-5, atol=1e-5), (loss, loss_ref)
    assert jnp.allclose(gt_mask, mask_ref), (gt_mask, mask_ref)

    # Second check: multi-tile grid + padded remainder columns.
    n_unlabeled2 = 300
    y2 = 4.0 * jax.random.normal(
        ky2, (batch_size + n_unlabeled2, num_classes), dtype=jnp.float32)
    loss2, gt_mask2 = pl_forward(x, y2, batch_size,
                                 threshold=threshold, num_classes=num_classes,
                                 tile_m=128)
    jax.block_until_ready((loss2, gt_mask2))
    loss2_ref, mask2_ref = _reference(y2, batch_size, threshold, num_classes)
    assert jnp.allclose(loss2, loss2_ref, rtol=1e-5, atol=1e-5), (loss2, loss2_ref)
    assert jnp.allclose(gt_mask2, mask2_ref), (gt_mask2, mask2_ref)

    # Third check: exact multiple of the tile (no padding path, static gate off).
    n_unlabeled3 = 252  # 252 + 4 labeled -> 256-row y, 252 unlabeled? no: use aligned M
    y3 = 4.0 * jax.random.normal(
        jax.random.PRNGKey(7), (batch_size + 256, num_classes), dtype=jnp.float32)
    loss3, gt_mask3 = pl_forward(x, y3, batch_size,
                                 threshold=threshold, num_classes=num_classes,
                                 tile_m=128)
    jax.block_until_ready((loss3, gt_mask3))
    loss3_ref, mask3_ref = _reference(y3, batch_size, threshold, num_classes)
    assert jnp.allclose(loss3, loss3_ref, rtol=1e-5, atol=1e-5), (loss3, loss3_ref)
    assert jnp.allclose(gt_mask3, mask3_ref), (gt_mask3, mask3_ref)

    print("KERNEL_OK")
</pallas_src>

<mosaic_0001>
module attributes {stable_mosaic.version = 11 : i64} {
  func.func @_pl_kernel(%arg0: i32, %arg1: memref<10x128xf32, #tpu.memory_space<vmem>>, %arg2: memref<1x1xf32, #tpu.memory_space<vmem>>, %arg3: memref<1x128xf32, #tpu.memory_space<vmem>>) attributes {dimension_semantics = [#tpu.dimension_semantics<arbitrary>], iteration_bounds = array<i64: 1>, scalar_prefetch = 0 : i64, scratch_operands = 0 : i64, tpu.core_type = #tpu.core_type<tc>, window_params = [{transform_indices = @transform_0, window_bounds = array<i64: 10, 128>}, {pipeline_mode = #tpu.pipeline_mode<synchronous>, transform_indices = @transform_1, window_bounds = array<i64: 1, 1>}, {transform_indices = @transform_2, window_bounds = array<i64: 1, 128>}]} {
    %c0_i32 = arith.constant 0 : i32
    %0 = arith.cmpi eq, %arg0, %c0_i32 : i32
    %1 = arith.extui %0 : i1 to i32
    %c0_i32_0 = arith.constant 0 : i32
    %2 = arith.cmpi ne, %1, %c0_i32_0 : i32
    scf.if %2 {
      %cst_15 = arith.constant 0.000000e+00 : f32
      %46 = vector.broadcast %cst_15 : f32 to vector<1x1xf32>
      %c0_16 = arith.constant 0 : index
      %c0_17 = arith.constant 0 : index
      %47 = vector.load %arg2[%c0_16, %c0_17] : memref<1x1xf32, #tpu.memory_space<vmem>>, vector<1x1xf32>
      tpu.vector_store %arg2[%c0_16, %c0_17], %46 {strides = array<i32>} : memref<1x1xf32, #tpu.memory_space<vmem>>, vector<1x1xf32>,
    } else {
    }
    %c0 = arith.constant 0 : index
    %c0_1 = arith.constant 0 : index
    %3 = vector.load %arg1[%c0, %c0_1] : memref<10x128xf32, #tpu.memory_space<vmem>>, vector<10x128xf32>
    %cst = arith.constant dense<0xFF800000> : vector<128xf32>
    %4 = vector.multi_reduction <maximumf>, %3, %cst [0] : vector<10x128xf32> to vector<128xf32>
    %5 = vector.shape_cast %4 : vector<128xf32> to vector<1x128xf32>
    %6 = vector.broadcast %5 : vector<1x128xf32> to vector<10x128xf32>
    %7 = arith.subf %3, %6 : vector<10x128xf32>
    %8 = math.exp %7 : vector<10x128xf32>
    %cst_2 = arith.constant dense<0.000000e+00> : vector<128xf32>
    %9 = vector.multi_reduction <add>, %8, %cst_2 [0] : vector<10x128xf32> to vector<128xf32>
    %10 = vector.shape_cast %9 : vector<128xf32> to vector<1x128xf32>
    %11 = arith.mulf %8, %7 : vector<10x128xf32>
    %cst_3 = arith.constant dense<0.000000e+00> : vector<128xf32>
    %12 = vector.multi_reduction <add>, %11, %cst_3 [0] : vector<10x128xf32> to vector<128xf32>
    %13 = vector.shape_cast %12 : vector<128xf32> to vector<1x128xf32>
    %cst_4 = arith.constant 1.000000e+00 : f32
    %14 = vector.broadcast %cst_4 : f32 to vector<1x128xf32>
    %15 = arith.divf %14, %10 : vector<1x128xf32>
    %16 = math.log %10 : vector<1x128xf32>
    %cst_5 = arith.constant 0.949999988 : f32
    %17 = vector.broadcast %cst_5 : f32 to vector<1x128xf32>
    %18 = arith.cmpf ogt, %15, %17 : vector<1x128xf32>
    %19 = arith.extui %18 : vector<1x128xi1> to vector<1x128xi32>
    %20 = arith.sitofp %19 : vector<1x128xi32> to vector<1x128xf32>
    %21 = arith.mulf %13, %15 : vector<1x128xf32>
    %22 = arith.subf %16, %21 : vector<1x128xf32>
    %cst_6 = arith.constant 1.000000e+01 : f32
    %23 = vector.broadcast %cst_6 : f32 to vector<1x128xf32>
    %24 = arith.mulf %23, %16 : vector<1x128xf32>
    %25 = arith.subf %24, %22 : vector<1x128xf32>
    %26 = arith.mulf %20, %25 : vector<1x128xf32>
    %27 = arith.addf %22, %26 : vector<1x128xf32>
    %c128_i32 = arith.constant 128 : i32
    %28 = arith.muli %arg0, %c128_i32 : i32
    %29 = tpu.iota {dimensions = array<i32: 1>} : vector<1x128xi32>
    %30 = vector.broadcast %28 : i32 to vector<1x128xi32>
    %31 = arith.addi %30, %29 : vector<1x128xi32>
    %c8_i32 = arith.constant 8 : i32
    %32 = vector.broadcast %c8_i32 : i32 to vector<1x128xi32>
    %33 = arith.cmpi slt, %31, %32 : vector<1x128xi32>
    %34 = arith.extui %33 : vector<1x128xi1> to vector<1x128xi32>
    %35 = arith.sitofp %34 : vector<1x128xi32> to vector<1x128xf32>
    %36 = arith.mulf %27, %35 : vector<1x128xf32>
    %37 = arith.mulf %20, %35 : vector<1x128xf32>
    %c0_7 = arith.constant 0 : index
    %c0_8 = arith.constant 0 : index
    %38 = vector.load %arg2[%c0_7, %c0_8] : memref<1x1xf32, #tpu.memory_space<vmem>>, vector<1x1xf32>
    %cst_9 = arith.constant dense<0.000000e+00> : vector<1xf32>
    %39 = vector.multi_reduction <add>, %36, %cst_9 [1] : vector<1x128xf32> to vector<1xf32>
    %40 = vector.shape_cast %39 : vector<1xf32> to vector<1x1xf32>
    %cst_10 = arith.constant 1.250000e-01 : f32
    %41 = vector.broadcast %cst_10 : f32 to vector<1x1xf32>
    %42 = arith.mulf %40, %41 : vector<1x1xf32>
    %43 = arith.addf %38, %42 : vector<1x1xf32>
    %c0_11 = arith.constant 0 : index
    %c0_12 = arith.constant 0 : index
    %44 = vector.load %arg2[%c0_11, %c0_12] : memref<1x1xf32, #tpu.memory_space<vmem>>, vector<1x1xf32>
    tpu.vector_store %arg2[%c0_11, %c0_12], %43 {strides = array<i32>} : memref<1x1xf32, #tpu.memory_space<vmem>>, vector<1x1xf32>,
    %c0_13 = arith.constant 0 : index
    %c0_14 = arith.constant 0 : index
    %45 = vector.load %arg3[%c0_13, %c0_14] : memref<1x128xf32, #tpu.memory_space<vmem>>, vector<1x128xf32>
    tpu.vector_store %arg3[%c0_13, %c0_14], %37 {strides = array<i32>} : memref<1x128xf32, #tpu.memory_space<vmem>>, vector<1x128xf32>,
    return
  }
  func.func @transform_0(%arg0: i32) -> (i32, i32) {
    %c0_i32 = arith.constant 0 : i32
    %c0_i32_0 = arith.constant 0 : i32
    return %c0_i32, %arg0 : i32, i32
  }
  func.func @transform_1(%arg0: i32) -> (i32, i32) {
    %c0_i32 = arith.constant 0 : i32
    %c0_i32_0 = arith.constant 0 : i32
    %c0_i32_1 = arith.constant 0 : i32
    return %c0_i32, %c0_i32_0 : i32, i32
  }
  func.func @transform_2(%arg0: i32) -> (i32, i32) {
    %c0_i32 = arith.constant 0 : i32
    %c0_i32_0 = arith.constant 0 : i32
    return %c0_i32, %arg0 : i32, i32
  }
}

</mosaic_0001>

<llo_original>
// kernel: tpu_custom_call.1
$region0: #{tpu_custom_call.1}
  #allocation0 [shape = 'u32[]', space=smem, size = 0x4, offset = 0x4, fixed_abs, tag = 'smem constant byte address 0x4 - core index']
  #allocation1 [shape = 'u32[72,128]{1,0:T(1,128)}', space=vmem, size = 0x9000, scoped, tag = 'internal scratch']
  %s0 = inlined_call_operand.hbm [shape: f32[10,128], index: 0, kind: input, shape index: {}]
  %s1 = inlined_call_operand.hbm [shape: f32[1,1], index: 1, kind: output, shape index: {0}]
  %s2 = inlined_call_operand.hbm [shape: f32[1,128], index: 2, kind: output, shape index: {1}]
  %3 = xla_tuple %s1, %s2
  %s4 = sld [smem:[#allocation0]]
  $region30: #{tpu_custom_call.1} parent=0
    _
  %s6 = ssub.s32 1, %s4
  %s7 = scalar_select 0, %s6, %s4
  $region1: #{tpu_custom_call.1} parent=0
    #allocation2 [shape = 'u8[8192]{0}', space=vmem, size = 0x2000, scoped, tag = 'input window, operand 0, single buffered']
    #allocation3 [shape = 's32[1]{0}', space=sflag, size = 0x4, scoped, tag = 'scoped memory for tpu_custom_call.1']
    #allocation4 [shape = 's32[1]{0}', space=sflag, size = 0x4, scoped, tag = 'scoped memory for tpu_custom_call.1']
    #allocation5 [shape = 'u8[512]{0}', space=vmem, size = 0x400, scoped, tag = 'output window, operand 0, single buffered']
    #allocation6 [shape = 'u8[512]{0}', space=vmem, size = 0x400, scoped, tag = 'output window, operand 1, single buffered']
    #allocation7 [shape = 's32[1]{0}', space=sflag, size = 0x4, scoped, tag = 'scoped memory for tpu_custom_call.1']
    %8 = vsyncpa [#allocation3], 0
    %9 = vsyncpa [#allocation4], 0
    %10 = vsyncpa [#allocation7], 0
    // Predicated region
    $region2: #{tpu_custom_call.1} parent=1 // pred_check
      _
    $region3: #{tpu_custom_call.1} parent=1 // pred_check_branch
      %12 = sbr.rel (0) target = $region5
    $region4: #{tpu_custom_call.1} parent=1 // pred_region
      %14 = vsyncadd [#allocation3], 0
      %s15 = sshll.u32 %s0, 4
      %s16 = int_to_ptr.hbm [resolvable:$true] %s15
      %s17 = sshll.u32 [#allocation2], 4
      %s18 = int_to_ptr.vmem [resolvable:$true] %s17
      %23 = dma.hbm_to_vmem [thread:$0]  %s16, 256, %s18, [#allocation3], 128, 128, 8
    $region5: #{tpu_custom_call.1} parent=1 // pred_fallthru
      _
    // Predicated region
    $region6: #{tpu_custom_call.1} parent=1 // pred_check
      _
    $region7: #{tpu_custom_call.1} parent=1 // pred_check_branch
      %25 = sbr.rel (0) target = $region9
    $region8: #{tpu_custom_call.1} parent=1 // pred_region
      %27 = dma.done [#allocation3], 256
    $region9: #{tpu_custom_call.1} parent=1 // pred_fallthru
      _
    %p28 = scmp.eq.s32.totalorder 0, 0
    // Predicated region
    $region10: #{tpu_custom_call.1} parent=1 // pred_check
      %p29 = pneg %p28
    $region11: #{tpu_custom_call.1} parent=1 // pred_check_branch
      %31 = sbr.rel (%p29) target = $region13
    $region12: #{tpu_custom_call.1} parent=1 // pred_region
      %vm32 = vcmask 0
      %33 = vst.msk [vmem:[#allocation5] sm:$0x1] %vm32, 0.0
    $region13: #{tpu_custom_call.1} parent=1 // pred_fallthru
      _
    %v34 = vld [vmem:[#allocation2] sm:$0xff]
    %v35 = vld [vmem:[#allocation2 + $0x8] sm:$0x3]
    %vm36 = vcmask 1041408
    %v37 = vsel %vm36, %v35, -inf
    %v38 = vmax.f32 %v34, %v37
    %v39 = vrot.slane %v38, 4
    %v40 = vmax.f32 %v38, %v39
    %v41 = vrot.slane %v40, 2
    %v42 = vmax.f32 %v40, %v41
    %v43 = vrot.slane %v42, 1
    %v44 = vmax.f32 %v42, %v43
    %v45 = vsub.f32 %v34, %v44
    %v46 = vsub.f32 %v35, %v44
    %v47 = vmul.f32 %v45, 1.442695
    %v48 = vpow.pop %v47
    %v49 = vmul.f32 %v46, 1.442695
    %v50 = vpow.pop %v49
    %v51 = vsel %vm36, %v50, 0.0
    %v52 = vadd.f32 %v48, %v51
    %v53 = vrot.slane %v52, 4
    %v54 = vadd.f32 %v52, %v53
    %v55 = vrot.slane %v54, 2
    %v56 = vadd.f32 %v54, %v55
    %v57 = vrot.slane %v56, 1
    %v58 = vadd.f32 %v56, %v57
    %v59 = vmul.f32 %v48, %v45
    %v60 = vmul.f32 %v50, %v46
    %v61 = vsel %vm36, %v60, 0.0
    %v62 = vadd.f32 %v59, %v61
    %v63 = vrot.slane %v62, 4
    %v64 = vadd.f32 %v62, %v63
    %v65 = vrot.slane %v64, 2
    %v66 = vadd.f32 %v64, %v65
    %v67 = vrot.slane %v66, 1
    %v68 = vadd.f32 %v66, %v67
    %v69 = vrcp.pop %v58
    %v70 = vmul.f32 %v58, %v69
    %v71 = vsub.f32 1.0, %v70
    %v72 = vmul.f32 %v69, %v71
    %v73 = vadd.f32 %v69, %v72
    %vm74 = vweird.f32 %v58
    %vm75 = vweird.f32 %v69
    %vm76 = vmor %vm74, %vm75
    %v77 = vsel %vm76, %v69, %v73
    %v78 = vand.u32 2147483647, %v58
    %vm79 = vcmp.eq.f32.partialorder %v78, 8.507059e+37
    %v80 = vand.u32 %v58, 2147483648
    %v81 = vor.u32 1.1754944e-38, %v80
    %v82 = vsel %vm79, %v81, %v77
    %v83 = vmul.f32 1.0, %v82
    %v84 = vlog2.pop %v58
    %v85 = vmul.f32 %v84, 0.6931472
    %vm86 = vcmp.gt.f32.partialorder %v83, 0.95
    %v87 = vsel %vm86, 1, 0
    %v88 = vcvt.s32.f32 %v87
    %v89 = vmul.f32 %v68, %v83
    %v90 = vsub.f32 %v85, %v89
    %v91 = vmul.f32 %v85, 10.0
    %v92 = vsub.f32 %v91, %v90
    %v93 = vmul.f32 %v88, %v92
    %v94 = vadd.f32 %v90, %v93
    %s95 = smul.u32 0, 128
    %v96 = vlaneseq
    %v97 = vand.u32 %v96, 127
    %v98 = vstv %s95
    %v99 = vadd.s32 %v98, %v97
    %vm100 = vcmp.lt.s32.totalorder %v99, 8
    %v101 = vsel %vm100, 1, 0
    %v102 = vcvt.s32.f32 %v101
    %v103 = vmul.f32 %v94, %v102
    %v104 = vmul.f32 %v88, %v102
    %v105 = vld [vmem:[#allocation5] sm:$0x1]
    %106 = vadd.xlane.f32.xlu0 %v103
    %v107 = vpop.xlane.xlu0 %106
    %v108 = vmul.f32 %v107, 0.125
    %v109 = vadd.f32 %v105, %v108
    %vm110 = vcmask 0
    %111 = vst.msk [vmem:[#allocation5] sm:$0x1] %vm110, %v109
    %112 = vst [vmem:[#allocation6] sm:$0x1] %v104
    // Predicated region
    $region14: #{tpu_custom_call.1} parent=1 // pred_check
      _
    $region15: #{tpu_custom_call.1} parent=1 // pred_check_branch
      %114 = sbr.rel (0) target = $region17
    $region16: #{tpu_custom_call.1} parent=1 // pred_region
      %116 = vsyncadd [#allocation4], 0
      %s118 = sshll.u32 [#allocation5], 4
      %s119 = int_to_ptr.vmem [resolvable:$true] %s118
      %s120 = sshll.u32 %s1, 4
      %s121 = int_to_ptr.hbm [resolvable:$true] %s120
      %123 = dma.vmem_to_hbm [thread:$0]  %s119, 16, %s121, [#allocation4]
    $region17: #{tpu_custom_call.1} parent=1 // pred_fallthru
      _
    // Predicated region
    $region18: #{tpu_custom_call.1} parent=1 // pred_check
      _
    $region19: #{tpu_custom_call.1} parent=1 // pred_check_branch
      %125 = sbr.rel (0) target = $region21
    $region20: #{tpu_custom_call.1} parent=1 // pred_region
      %127 = vsyncadd [#allocation7], 0
      %s129 = sshll.u32 [#allocation6], 4
      %s130 = int_to_ptr.vmem [resolvable:$true] %s129
      %s131 = sshll.u32 %s2, 4
      %s132 = int_to_ptr.hbm [resolvable:$true] %s131
      %134 = dma.vmem_to_hbm [thread:$0]  %s130, 16, %s132, [#allocation7]
    $region21: #{tpu_custom_call.1} parent=1 // pred_fallthru
      _
    // Predicated region
    $region22: #{tpu_custom_call.1} parent=1 // pred_check
      _
    $region23: #{tpu_custom_call.1} parent=1 // pred_check_branch
      %136 = sbr.rel (0) target = $region25
    $region24: #{tpu_custom_call.1} parent=1 // pred_region
      %138 = dma.done [#allocation4], 16
    $region25: #{tpu_custom_call.1} parent=1 // pred_fallthru
      _
    // Predicated region
    $region26: #{tpu_custom_call.1} parent=1 // pred_check
      _
    $region27: #{tpu_custom_call.1} parent=1 // pred_check_branch
      %140 = sbr.rel (0) target = $region29
    $region28: #{tpu_custom_call.1} parent=1 // pred_region
      %142 = dma.done [#allocation7], 16
    $region29: #{tpu_custom_call.1} parent=1 // pred_fallthru
      _
    %143 = vsyncpa [#allocation3], 1
    %144 = vsyncpa [#allocation4], 1
    %145 = vsyncpa [#allocation7], 1

</llo_original>
